<compile_context>
chip_gen: v5e
topology: v5e:2x2
jax: 0.10.0
libtpu: 0.0.40
codegen_flags: <defaults>
</compile_context>

<pallas_src>
import functools

import jax
import jax.numpy as jnp
from jax.experimental import pallas as pl
from jax.experimental.pallas import tpu as pltpu


def _round_up(n, m):
    return ((n + m - 1) // m) * m


# ---------------------------------------------------------------------------
# Kernels
# ---------------------------------------------------------------------------
def _affine_sigmoid_row(x_ref, w_ref, b_ref):
    """sigmoid(w @ x^T + b) computed lane-dense: returns [1, TILE_B] f32."""
    # w_ref: [1, D], x_ref: [TILE_B, D], contract over D (rhs transposed).
    z = jax.lax.dot_general(
        w_ref[...], x_ref[...],
        dimension_numbers=(((1,), (1,)), ((), ())),
        preferred_element_type=jnp.float32,
        precision=jax.lax.Precision.HIGHEST,
    )
    return jax.nn.sigmoid(z + b_ref[...])          # [1, TILE_B]


def fused_predict_kernel(x_ref, w_ref, b_ref, o_ref):
    # o_ref: [1, TILE_B] — lane-dense output block.
    o_ref[...] = _affine_sigmoid_row(x_ref, w_ref, b_ref).astype(o_ref.dtype)


def fused_loss_kernel(x_ref, y_ref, w_ref, b_ref, sse_ref, *, tile_b, n_valid):
    # Accumulates sum((sigmoid(x@W+b) - y)^2) over the batch grid into a
    # (1,1) output-resident block.  Padded columns (>= n_valid) are masked.
    i = pl.program_id(0)

    @pl.when(i == 0)
    def _():
        sse_ref[...] = jnp.zeros_like(sse_ref)

    pred = _affine_sigmoid_row(x_ref, w_ref, b_ref)      # [1, TILE_B]
    err = pred - y_ref[...]                              # [1, TILE_B]

    col = jax.lax.broadcasted_iota(jnp.int32, (1, tile_b), 1) + i * tile_b
    err = jnp.where(col < n_valid, err, 0.0)

    sse_ref[...] += jnp.sum(err * err, axis=1, keepdims=True)   # (1, 1)


# ---------------------------------------------------------------------------
# Wrappers
# ---------------------------------------------------------------------------
def _fuse_params(params):
    """Collapse the activation-free Linear chain into one affine map (f32)."""
    w1, b1 = params["w1"], params["b1"]          # [D,10], [1,10]
    w2, b2 = params["w2"], params["b2"]          # [10,15], [1,15]
    w3, b3 = params["w3"], params["b3"]          # [15,1], [1,1]
    w_fused = w1 @ w2 @ w3                       # [D, 1]
    b_fused = b1 @ w2 @ w3 + b2 @ w3 + b3        # [1, 1]
    return w_fused.T.astype(jnp.float32), b_fused.astype(jnp.float32)


def _tiling(batch, max_tile_b):
    """Pick a batch tile: big (overhead amortization) but with bounded
    padding waste; multi-tile case rounds to 128 so the lane-dense output
    block satisfies the (8,128) rule."""
    n_tiles = -(-batch // max_tile_b)
    if n_tiles == 1:
        tile_b = _round_up(batch, 16)            # single tile = full extent
    else:
        tile_b = _round_up(-(-batch // n_tiles), 128)
    b_pad = _round_up(batch, tile_b)
    return tile_b, b_pad


def torch_model_forward(x, params, *, max_tile_b=4096):
    """x: [B, D] float. Returns sigmoid predictions [B, 1] float32."""
    B, D = x.shape
    w_row, b_fused = _fuse_params(params)
    tile_b, b_pad = _tiling(B, max_tile_b)

    x_in = x if b_pad == B else jnp.pad(x, ((0, b_pad - B), (0, 0)))

    y_row = pl.pallas_call(
        fused_predict_kernel,
        out_shape=jax.ShapeDtypeStruct((1, b_pad), jnp.float32),
        grid=(b_pad // tile_b,),
        in_specs=[
            pl.BlockSpec((tile_b, D), lambda i: (i, 0)),
            pl.BlockSpec((1, D), lambda i: (0, 0)),   # weight VMEM-resident
            pl.BlockSpec((1, 1), lambda i: (0, 0)),   # bias VMEM-resident
        ],
        out_specs=pl.BlockSpec((1, tile_b), lambda i: (0, i)),  # lane-dense
        compiler_params=pltpu.CompilerParams(
            dimension_semantics=("parallel",)),        # megacore / v7x 2-TC
    )(x_in, w_row, b_fused)

    # [1, b_pad] -> [B, 1]  (tiny layout plumbing outside the kernel)
    return y_row[:, :B].T


def torch_model_loss(x, y, params, *, max_tile_b=4096):
    """Fused forward + MSE loss (mean reduction); returns a scalar."""
    B, D = x.shape
    w_row, b_fused = _fuse_params(params)
    tile_b, b_pad = _tiling(B, max_tile_b)

    x_in = x if b_pad == B else jnp.pad(x, ((0, b_pad - B), (0, 0)))
    y_row = jnp.reshape(y.astype(jnp.float32), (1, B))
    if b_pad != B:
        y_row = jnp.pad(y_row, ((0, 0), (0, b_pad - B)))

    kernel = functools.partial(fused_loss_kernel, tile_b=tile_b, n_valid=B)
    sse = pl.pallas_call(
        kernel,
        out_shape=jax.ShapeDtypeStruct((1, 1), jnp.float32),
        grid=(b_pad // tile_b,),
        in_specs=[
            pl.BlockSpec((tile_b, D), lambda i: (i, 0)),
            pl.BlockSpec((1, tile_b), lambda i: (0, i)),
            pl.BlockSpec((1, D), lambda i: (0, 0)),
            pl.BlockSpec((1, 1), lambda i: (0, 0)),
        ],
        out_specs=pl.BlockSpec((1, 1), lambda i: (0, 0)),  # output-resident acc
        compiler_params=pltpu.CompilerParams(
            dimension_semantics=("arbitrary",)),            # reduction axis
    )(x_in, y_row, w_row, b_fused)
    return sse[0, 0] / jnp.float32(B)


def torch_model(x, params, y=None):
    if y is not None:
        return torch_model_loss(x, y, params)
    return torch_model_forward(x, params)


def init_params(key, input_size):
    # PyTorch nn.Linear default init: U(-1/sqrt(fan_in), +1/sqrt(fan_in)),
    # weights stored as [in, out] (transposed from torch's [out, in]).
    def linear(k, fan_in, fan_out):
        kw, kb = jax.random.split(k)
        bound = 1.0 / jnp.sqrt(jnp.float32(fan_in))
        w = jax.random.uniform(kw, (fan_in, fan_out), jnp.float32, -bound, bound)
        b = jax.random.uniform(kb, (1, fan_out), jnp.float32, -bound, bound)
        return w, b

    k1, k2, k3 = jax.random.split(key, 3)
    w1, b1 = linear(k1, input_size, 10)
    w2, b2 = linear(k2, 10, 15)
    w3, b3 = linear(k3, 15, 1)
    return {"w1": w1, "b1": b1, "w2": w2, "b2": b2, "w3": w3, "b3": b3}


if __name__ == "__main__":
    key = jax.random.PRNGKey(0)
    kx, ky, kp = jax.random.split(key, 3)

    batch, input_size = 8, 32
    x = jax.random.normal(kx, (batch, input_size), jnp.float32)
    y = jax.random.uniform(ky, (batch, 1), jnp.float32)
    params = init_params(kp, input_size)

    # Prediction path (y=None)
    y_pred = jax.block_until_ready(torch_model(x, params))

    # Loss path (y provided) — fused MSE kernel
    loss = jax.block_until_ready(torch_model(x, params, y))

    # Pure-JAX f32 reference of the *unfused* 3-layer chain (matches PyTorch).
    ref_h = x @ params["w1"] + params["b1"]
    ref_h = ref_h @ params["w2"] + params["b2"]
    ref_h = ref_h @ params["w3"] + params["b3"]
    ref_pred = jax.nn.sigmoid(ref_h)
    ref_loss = jnp.mean((ref_pred - y) ** 2)

    assert y_pred.shape == (batch, 1)
    assert jnp.allclose(y_pred, ref_pred, atol=1e-4, rtol=1e-4), (
        jnp.max(jnp.abs(y_pred - ref_pred)))
    assert jnp.abs(loss - ref_loss) < 1e-4, (loss, ref_loss)

    print("KERNEL_OK")
</pallas_src>

<mosaic_0001>
module attributes {stable_mosaic.version = 11 : i64} {
  func.func @fused_predict_kernel(%arg0: i32, %arg1: memref<16x32xf32, #tpu.memory_space<vmem>>, %arg2: memref<1x32xf32, #tpu.memory_space<vmem>>, %arg3: memref<1x1xf32, #tpu.memory_space<vmem>>, %arg4: memref<1x16xf32, #tpu.memory_space<vmem>>) attributes {dimension_semantics = [#tpu.dimension_semantics<parallel>], iteration_bounds = array<i64: 1>, scalar_prefetch = 0 : i64, scratch_operands = 0 : i64, tpu.core_type = #tpu.core_type<tc>, window_params = [{transform_indices = @transform_0, window_bounds = array<i64: 16, 32>}, {pipeline_mode = #tpu.pipeline_mode<synchronous>, transform_indices = @transform_1, window_bounds = array<i64: 1, 32>}, {pipeline_mode = #tpu.pipeline_mode<synchronous>, transform_indices = @transform_2, window_bounds = array<i64: 1, 1>}, {transform_indices = @transform_3, window_bounds = array<i64: 1, 16>}]} {
    %c0 = arith.constant 0 : index
    %c0_0 = arith.constant 0 : index
    %0 = vector.load %arg2[%c0, %c0_0] : memref<1x32xf32, #tpu.memory_space<vmem>>, vector<1x32xf32>
    %c0_1 = arith.constant 0 : index
    %c0_2 = arith.constant 0 : index
    %1 = vector.load %arg1[%c0_1, %c0_2] : memref<16x32xf32, #tpu.memory_space<vmem>>, vector<16x32xf32>
    %cst = arith.constant dense<0.000000e+00> : vector<1x16xf32>
    %2 = tpu.matmul %0, %1, %cst {dimension_numbers = #tpu.dot_dimension_numbers<[1], [1], [0], [0], [0, 0, 1, 0], [], []>, precision = #tpu.contract_precision<fp32>} : vector<1x32xf32>, vector<16x32xf32>, vector<1x16xf32> -> vector<1x16xf32>
    %c0_3 = arith.constant 0 : index
    %c0_4 = arith.constant 0 : index
    %3 = vector.load %arg3[%c0_3, %c0_4] : memref<1x1xf32, #tpu.memory_space<vmem>>, vector<1x1xf32>
    %4 = vector.broadcast %3 : vector<1x1xf32> to vector<1x16xf32>
    %5 = arith.addf %2, %4 : vector<1x16xf32>
    %6 = arith.negf %5 : vector<1x16xf32>
    %7 = math.exp %6 : vector<1x16xf32>
    %cst_5 = arith.constant 1.000000e+00 : f32
    %8 = vector.broadcast %cst_5 : f32 to vector<1x16xf32>
    %9 = arith.addf %8, %7 : vector<1x16xf32>
    %10 = arith.divf %8, %9 : vector<1x16xf32>
    %c0_6 = arith.constant 0 : index
    %c0_7 = arith.constant 0 : index
    %11 = vector.load %arg4[%c0_6, %c0_7] : memref<1x16xf32, #tpu.memory_space<vmem>>, vector<1x16xf32>
    tpu.vector_store %arg4[%c0_6, %c0_7], %10 {strides = array<i32>} : memref<1x16xf32, #tpu.memory_space<vmem>>, vector<1x16xf32>,
    return
  }
  func.func @transform_0(%arg0: i32) -> (i32, i32) {
    %c0_i32 = arith.constant 0 : i32
    %c0_i32_0 = arith.constant 0 : i32
    return %arg0, %c0_i32 : i32, i32
  }
  func.func @transform_1(%arg0: i32) -> (i32, i32) {
    %c0_i32 = arith.constant 0 : i32
    %c0_i32_0 = arith.constant 0 : i32
    %c0_i32_1 = arith.constant 0 : i32
    return %c0_i32, %c0_i32_0 : i32, i32
  }
  func.func @transform_2(%arg0: i32) -> (i32, i32) {
    %c0_i32 = arith.constant 0 : i32
    %c0_i32_0 = arith.constant 0 : i32
    %c0_i32_1 = arith.constant 0 : i32
    return %c0_i32, %c0_i32_0 : i32, i32
  }
  func.func @transform_3(%arg0: i32) -> (i32, i32) {
    %c0_i32 = arith.constant 0 : i32
    %c0_i32_0 = arith.constant 0 : i32
    return %c0_i32, %arg0 : i32, i32
  }
}

</mosaic_0001>

<llo_original>
// kernel: tpu_custom_call.1
$region0: #{tpu_custom_call.1}
  #allocation0 [shape = 'u32[]', space=smem, size = 0x4, offset = 0x4, fixed_abs, tag = 'smem constant byte address 0x4 - core index']
  #allocation1 [shape = 'u32[72,128]{1,0:T(1,128)}', space=vmem, size = 0x9000, scoped, tag = 'internal scratch']
  #allocation2 [shape = 'f32[1,1]{1,0:T(1,128)S(1)}', space=vmem, size = 0x200, scoped, tag = 'scoped memory for tpu_custom_call.1']
  %s0 = inlined_call_operand.hbm [shape: f32[16,32], index: 0, kind: input, shape index: {}]
  %s1 = inlined_call_operand.vmem [shape: f32[1,32], index: 1, kind: input, shape index: {}]
  %s2 = inlined_call_operand.<no memory space> [shape: f32[1,1], index: 2, kind: input, shape index: {}]
  %s3 = inlined_call_operand.hbm [shape: f32[1,16], index: 3, kind: output, shape index: {}]
  %s4 = sld [smem:[#allocation0]]
  $region26: #{tpu_custom_call.1} parent=0
    _
  %s6 = ssub.s32 1, %s4
  %s7 = scalar_select 0, %s6, %s4
  %v8 = vstv %s2
  %9 = vst [vmem:[#allocation2] sm:$0x1] %v8
  $region1: #{tpu_custom_call.1} parent=0
    #allocation3 [shape = 'u8[8192]{0}', space=vmem, size = 0x2000, scoped, tag = 'input window, operand 0, single buffered']
    #allocation4 [shape = 's32[1]{0}', space=sflag, size = 0x4, scoped, tag = 'scoped memory for tpu_custom_call.1']
    #allocation5 [shape = 's32[1]{0}', space=sflag, size = 0x4, scoped, tag = 'scoped memory for tpu_custom_call.1']
    #allocation6 [shape = 'u8[512]{0}', space=vmem, size = 0x400, scoped, tag = 'output window, operand 0, single buffered']
    %10 = vsyncpa [#allocation4], 0
    %11 = vsyncpa [#allocation5], 0
    // Predicated region
    $region2: #{tpu_custom_call.1} parent=1 // pred_check
      _
    $region3: #{tpu_custom_call.1} parent=1 // pred_check_branch
      %13 = sbr.rel (0) target = $region5
    $region4: #{tpu_custom_call.1} parent=1 // pred_region
      %15 = vsyncadd [#allocation4], 0
      %s16 = sshll.u32 %s0, 4
      %s17 = int_to_ptr.hbm [resolvable:$true] %s16
      %s18 = sshll.u32 [#allocation3], 4
      %s19 = int_to_ptr.vmem [resolvable:$true] %s18
      %24 = dma.hbm_to_vmem [thread:$0]  %s17, 256, %s19, [#allocation4], 128, 128, 8
    $region5: #{tpu_custom_call.1} parent=1 // pred_fallthru
      _
    // Predicated region
    $region6: #{tpu_custom_call.1} parent=1 // pred_check
      _
    $region7: #{tpu_custom_call.1} parent=1 // pred_check_branch
      %26 = sbr.rel (0) target = $region9
    $region8: #{tpu_custom_call.1} parent=1 // pred_region
      _
    $region9: #{tpu_custom_call.1} parent=1 // pred_fallthru
      _
    // Predicated region
    $region10: #{tpu_custom_call.1} parent=1 // pred_check
      _
    $region11: #{tpu_custom_call.1} parent=1 // pred_check_branch
      %28 = sbr.rel (0) target = $region13
    $region12: #{tpu_custom_call.1} parent=1 // pred_region
      _
    $region13: #{tpu_custom_call.1} parent=1 // pred_fallthru
      _
    // Predicated region
    $region14: #{tpu_custom_call.1} parent=1 // pred_check
      _
    $region15: #{tpu_custom_call.1} parent=1 // pred_check_branch
      %30 = sbr.rel (0) target = $region17
    $region16: #{tpu_custom_call.1} parent=1 // pred_region
      %32 = dma.done [#allocation4], 256
    $region17: #{tpu_custom_call.1} parent=1 // pred_fallthru
      _
    %v33 = vld [vmem:[%s1] sm:$0x1]
    %v34 = vld [vmem:[#allocation3] sm:$0xff]
    %v35 = vld [vmem:[#allocation3 + $0x8] sm:$0xff]
    %v36 = vld [vmem:[#allocation2] sm:$0x1]
    %38 = vset.pattern.permute.xlu0 0
    %39 = vperm.xlu0 %38, %v36
    %v40 = vpop.permute.xlu0 %39
    %v42 = vperm.slane %v40, 0
    %vm43 = vcmask 261120
    %v45 = vsel %vm43, %v33, 0
    %v48 = vsel %vm43, %v34, 0
    %v51 = vsel %vm43, %v35, 0
    %53 = vmatpush.xpose.msra.mxu0 0.0
    %54 = vmatpush.xpose.msra.mxu0 0.0
    %55 = vmatpush.xpose.msra.mxu0 0.0
    %56 = vmatpush.xpose.msra.mxu0 0.0
    %57 = vmatpush.xpose.msra.mxu0 0.0
    %58 = vmatpush.xpose.msra.mxu0 0.0
    %59 = vmatpush.xpose.msra.mxu0 0.0
    %60 = vmatpush.xpose.msra.mxu0 0.0
    %61 = vmatpush.xpose.msra.mxu0 0.0
    %62 = vmatpush.xpose.msra.mxu0 0.0
    %63 = vmatpush.xpose.msra.mxu0 0.0
    %64 = vmatpush.xpose.msra.mxu0 0.0
    %65 = vmatpush.xpose.msra.mxu0 0.0
    %66 = vmatpush.xpose.msra.mxu0 0.0
    %v67 = vand.u32 %v51, 4294901760
    %68 = vmatpush.xpose.msra.mxu0 %v67
    %v69 = vand.u32 %v48, 4294901760
    %70 = vmatpush.xpose.msra.mxu0 %v69
    %v71 = vand.u32 %v45, 4294901760
    %v72 = vsub.f32 %v45, %v71
    %v73 = vand.u32 %v72, 4294901760
    %v74 = vsub.f32 %v72, %v73
    %v75 = vand.u32 %v74, 4294901760
    %76 = vmatmul.f32.gmra.mxu0 %v75
    %v77 = vpop.f32.mrf.mxu0
    %v78 = vadd.f32 %v42, %v77
    %79 = vdwg.mxu0
    %80 = vmatpush.xpose.msra.mxu0 0.0
    %81 = vmatpush.xpose.msra.mxu0 0.0
    %82 = vmatpush.xpose.msra.mxu0 0.0
    %83 = vmatpush.xpose.msra.mxu0 0.0
    %84 = vmatpush.xpose.msra.mxu0 0.0
    %85 = vmatpush.xpose.msra.mxu0 0.0
    %86 = vmatpush.xpose.msra.mxu0 0.0
    %87 = vmatpush.xpose.msra.mxu0 0.0
    %88 = vmatpush.xpose.msra.mxu0 0.0
    %89 = vmatpush.xpose.msra.mxu0 0.0
    %90 = vmatpush.xpose.msra.mxu0 0.0
    %91 = vmatpush.xpose.msra.mxu0 0.0
    %92 = vmatpush.xpose.msra.mxu0 0.0
    %93 = vmatpush.xpose.msra.mxu0 0.0
    %v94 = vand.u32 %v51, 4294901760
    %v95 = vsub.f32 %v51, %v94
    %v96 = vand.u32 %v95, 4294901760
    %v97 = vsub.f32 %v95, %v96
    %v98 = vand.u32 %v97, 4294901760
    %99 = vmatpush.xpose.msra.mxu0 %v98
    %v100 = vand.u32 %v48, 4294901760
    %v101 = vsub.f32 %v48, %v100
    %v102 = vand.u32 %v101, 4294901760
    %v103 = vsub.f32 %v101, %v102
    %v104 = vand.u32 %v103, 4294901760
    %105 = vmatpush.xpose.msra.mxu0 %v104
    %v106 = vand.u32 %v45, 4294901760
    %107 = vmatmul.f32.gmra.mxu0 %v106
    %v108 = vpop.f32.mrf.mxu0
    %v109 = vadd.f32 %v78, %v108
    %110 = vdwg.mxu0
    %111 = vmatpush.xpose.msra.mxu0 0.0
    %112 = vmatpush.xpose.msra.mxu0 0.0
    %113 = vmatpush.xpose.msra.mxu0 0.0
    %114 = vmatpush.xpose.msra.mxu0 0.0
    %115 = vmatpush.xpose.msra.mxu0 0.0
    %116 = vmatpush.xpose.msra.mxu0 0.0
    %117 = vmatpush.xpose.msra.mxu0 0.0
    %118 = vmatpush.xpose.msra.mxu0 0.0
    %119 = vmatpush.xpose.msra.mxu0 0.0
    %120 = vmatpush.xpose.msra.mxu0 0.0
    %121 = vmatpush.xpose.msra.mxu0 0.0
    %122 = vmatpush.xpose.msra.mxu0 0.0
    %123 = vmatpush.xpose.msra.mxu0 0.0
    %124 = vmatpush.xpose.msra.mxu0 0.0
    %v125 = vand.u32 %v51, 4294901760
    %v126 = vsub.f32 %v51, %v125
    %127 = vmatpush.xpose.msra.mxu0 %v126
    %v128 = vand.u32 %v48, 4294901760
    %v129 = vsub.f32 %v48, %v128
    %130 = vmatpush.xpose.msra.mxu0 %v129
    %v131 = vand.u32 %v45, 4294901760
    %v132 = vsub.f32 %v45, %v131
    %133 = vmatmul.f32.gmra.mxu0 %v132
    %v134 = vpop.f32.mrf.mxu0
    %v135 = vadd.f32 %v109, %v134
    %136 = vdwg.mxu0
    %137 = vmatpush.xpose.msra.mxu0 0.0
    %138 = vmatpush.xpose.msra.mxu0 0.0
    %139 = vmatpush.xpose.msra.mxu0 0.0
    %140 = vmatpush.xpose.msra.mxu0 0.0
    %141 = vmatpush.xpose.msra.mxu0 0.0
    %142 = vmatpush.xpose.msra.mxu0 0.0
    %143 = vmatpush.xpose.msra.mxu0 0.0
    %144 = vmatpush.xpose.msra.mxu0 0.0
    %145 = vmatpush.xpose.msra.mxu0 0.0
    %146 = vmatpush.xpose.msra.mxu0 0.0
    %147 = vmatpush.xpose.msra.mxu0 0.0
    %148 = vmatpush.xpose.msra.mxu0 0.0
    %149 = vmatpush.xpose.msra.mxu0 0.0
    %150 = vmatpush.xpose.msra.mxu0 0.0
    %v151 = vand.u32 %v51, 4294901760
    %152 = vmatpush.xpose.msra.mxu0 %v151
    %v153 = vand.u32 %v48, 4294901760
    %154 = vmatpush.xpose.msra.mxu0 %v153
    %v155 = vand.u32 %v45, 4294901760
    %v156 = vsub.f32 %v45, %v155
    %v157 = vand.u32 %v156, 4294901760
    %158 = vmatmul.f32.gmra.mxu0 %v157
    %v159 = vpop.f32.mrf.mxu0
    %v160 = vadd.f32 %v135, %v159
    %161 = vdwg.mxu0
    %162 = vmatpush.xpose.msra.mxu0 0.0
    %163 = vmatpush.xpose.msra.mxu0 0.0
    %164 = vmatpush.xpose.msra.mxu0 0.0
    %165 = vmatpush.xpose.msra.mxu0 0.0
    %166 = vmatpush.xpose.msra.mxu0 0.0
    %167 = vmatpush.xpose.msra.mxu0 0.0
    %168 = vmatpush.xpose.msra.mxu0 0.0
    %169 = vmatpush.xpose.msra.mxu0 0.0
    %170 = vmatpush.xpose.msra.mxu0 0.0
    %171 = vmatpush.xpose.msra.mxu0 0.0
    %172 = vmatpush.xpose.msra.mxu0 0.0
    %173 = vmatpush.xpose.msra.mxu0 0.0
    %174 = vmatpush.xpose.msra.mxu0 0.0
    %175 = vmatpush.xpose.msra.mxu0 0.0
    %v176 = vand.u32 %v51, 4294901760
    %v177 = vsub.f32 %v51, %v176
    %v178 = vand.u32 %v177, 4294901760
    %179 = vmatpush.xpose.msra.mxu0 %v178
    %v180 = vand.u32 %v48, 4294901760
    %v181 = vsub.f32 %v48, %v180
    %v182 = vand.u32 %v181, 4294901760
    %183 = vmatpush.xpose.msra.mxu0 %v182
    %v184 = vand.u32 %v45, 4294901760
    %185 = vmatmul.f32.gmra.mxu0 %v184
    %v186 = vpop.f32.mrf.mxu0
    %v187 = vadd.f32 %v160, %v186
    %188 = vdwg.mxu0
    %189 = vmatpush.xpose.msra.mxu0 0.0
    %190 = vmatpush.xpose.msra.mxu0 0.0
    %191 = vmatpush.xpose.msra.mxu0 0.0
    %192 = vmatpush.xpose.msra.mxu0 0.0
    %193 = vmatpush.xpose.msra.mxu0 0.0
    %194 = vmatpush.xpose.msra.mxu0 0.0
    %195 = vmatpush.xpose.msra.mxu0 0.0
    %196 = vmatpush.xpose.msra.mxu0 0.0
    %197 = vmatpush.xpose.msra.mxu0 0.0
    %198 = vmatpush.xpose.msra.mxu0 0.0
    %199 = vmatpush.xpose.msra.mxu0 0.0
    %200 = vmatpush.xpose.msra.mxu0 0.0
    %201 = vmatpush.xpose.msra.mxu0 0.0
    %202 = vmatpush.xpose.msra.mxu0 0.0
    %v203 = vand.u32 %v51, 4294901760
    %204 = vmatpush.xpose.msra.mxu0 %v203
    %v205 = vand.u32 %v48, 4294901760
    %206 = vmatpush.xpose.msra.mxu0 %v205
    %v207 = vand.u32 %v45, 4294901760
    %208 = vmatmul.f32.gmra.mxu0 %v207
    %v209 = vpop.f32.mrf.mxu0
    %v210 = vadd.f32 %v187, %v209
    %211 = vdwg.mxu0
    %v212 = vxor.u32 %v210, 2147483648
    %v213 = vmul.f32 %v212, 1.442695
    %v214 = vpow.pop %v213
    %v215 = vadd.f32 %v214, 1.0
    %v216 = vrcp.pop %v215
    %v217 = vmul.f32 %v215, %v216
    %v218 = vsub.f32 1.0, %v217
    %v219 = vmul.f32 %v216, %v218
    %v220 = vadd.f32 %v216, %v219
    %vm221 = vweird.f32 %v215
    %vm222 = vweird.f32 %v216
    %vm223 = vmor %vm221, %vm222
    %v224 = vsel %vm223, %v216, %v220
    %v225 = vand.u32 2147483647, %v215
    %vm226 = vcmp.eq.f32.partialorder %v225, 8.507059e+37
    %v227 = vand.u32 %v215, 2147483648
    %v228 = vor.u32 1.1754944e-38, %v227
    %v229 = vsel %vm226, %v228, %v224
    %v230 = vmul.f32 1.0, %v229
    %vm231 = vcmask 122880
    %232 = vst.msk [vmem:[#allocation6] sm:$0x1] %vm231, %v230
    // Predicated region
    $region18: #{tpu_custom_call.1} parent=1 // pred_check
      _
    $region19: #{tpu_custom_call.1} parent=1 // pred_check_branch
      %234 = sbr.rel (0) target = $region21
    $region20: #{tpu_custom_call.1} parent=1 // pred_region
      %236 = vsyncadd [#allocation5], 0
      %s238 = sshll.u32 [#allocation6], 4
      %s239 = int_to_ptr.vmem [resolvable:$true] %s238
      %s240 = sshll.u32 %s3, 4
      %s241 = int_to_ptr.hbm [resolvable:$true] %s240
      %243 = dma.vmem_to_hbm [thread:$0]  %s239, 16, %s241, [#allocation5]
    $region21: #{tpu_custom_call.1} parent=1 // pred_fallthru
      _
    // Predicated region
    $region22: #{tpu_custom_call.1} parent=1 // pred_check
      _
    $region23: #{tpu_custom_call.1} parent=1 // pred_check_branch
      %245 = sbr.rel (0) target = $region25
    $region24: #{tpu_custom_call.1} parent=1 // pred_region
      %247 = dma.done [#allocation5], 16
    $region25: #{tpu_custom_call.1} parent=1 // pred_fallthru
      _
    %248 = vsyncpa [#allocation4], 1
    %249 = vsyncpa [#allocation5], 1

</llo_original>
